<compile_context>
chip_gen: v6e
topology: v6e:2x2x1
jax: 0.10.0
libtpu: 0.0.40
codegen_flags: <defaults>
</compile_context>

<pallas_src>
import jax
import jax.numpy as jnp
from jax import lax
from jax.experimental import pallas as pl
from jax.experimental.pallas import tpu as pltpu

TILE_B_MAX = 1024   # rows per grid step (review: 512-2048; ~3 MiB VMEM at 1024)
MIN_TILE_B = 8      # sublane alignment


def _round_up(x, m):
    return ((x + m - 1) // m) * m


def _routing_kernel(num_experts):
    """Kernel body. Closes over only the static expert count (layout constant)."""

    def kernel(x_ref, bits_ref, w1_ref, b1_ref, w2_ref, b2_ref, out_ref):
        # fc1 (bf16 MXU, f32 accumulate) + bias + ReLU.
        h = jnp.dot(x_ref[...], w1_ref[...], preferred_element_type=jnp.float32)
        h = jnp.maximum(h + b1_ref[...], 0.0)
        # fc2 (bf16 MXU, f32 accumulate) + bias. Output is narrow (tile_b, E+1).
        logits = jnp.dot(h.astype(w2_ref.dtype), w2_ref[...],
                         preferred_element_type=jnp.float32) + b2_ref[...]

        # Visit-budget mask from the per-row bitmask: bit e set <=> expert e over budget.
        col = lax.broadcasted_iota(jnp.int32, logits.shape, dimension=1)
        shift = jnp.minimum(col, 31)                       # keep shift amount valid
        over = (jnp.right_shift(bits_ref[...], shift) & 1) == 1
        over = jnp.logical_and(over, col < num_experts)    # never mask "terminate"
        out_ref[...] = jnp.where(over, -jnp.inf, logits)

    return kernel


def prepare_routing_params(w1, b1, w2, b2, num_experts, compute_dtype=jnp.bfloat16):
    """One-time parameter prep.

    w1: (input_dim, hidden), b1: (hidden,), w2: (hidden, num_experts+1), b2: (num_experts+1,)
    Returns:
      w1_p: (input_dim, hidden_pad) compute_dtype   (hidden zero-padded to 128 multiple)
      b1_p: (1, hidden_pad) f32
      w2_p: (hidden_pad, num_experts+1) compute_dtype
      b2_p: (1, num_experts+1) f32
    Zero-padded hidden rows/cols contribute exactly 0, so results are unchanged.
    """
    input_dim, hidden = w1.shape
    out_dim = num_experts + 1
    hidden_pad = _round_up(hidden, 128)

    w1_p = jnp.zeros((input_dim, hidden_pad), compute_dtype)
    w1_p = w1_p.at[:, :hidden].set(w1.astype(compute_dtype))
    b1_p = jnp.zeros((1, hidden_pad), jnp.float32)
    b1_p = b1_p.at[0, :hidden].set(b1.astype(jnp.float32))

    w2_p = jnp.zeros((hidden_pad, out_dim), compute_dtype)
    w2_p = w2_p.at[:hidden, :].set(w2.astype(compute_dtype))
    b2_p = b2.astype(jnp.float32).reshape(1, out_dim)
    return w1_p, b1_p, w2_p, b2_p


def _routing_forward_xla(x, bits, w1_p, b1_p, w2_p, b2_p, num_experts):
    """Plain-XLA path for tiny batches (kernel-launch-latency dominated regime)."""
    h = jnp.maximum(
        jnp.dot(x.astype(w1_p.dtype), w1_p, preferred_element_type=jnp.float32)
        + b1_p, 0.0)
    logits = jnp.dot(h.astype(w2_p.dtype), w2_p,
                     preferred_element_type=jnp.float32) + b2_p
    col = jnp.arange(logits.shape[-1], dtype=jnp.int32)[None, :]
    over = ((jnp.right_shift(bits, jnp.minimum(col, 31)) & 1) == 1) & (col < num_experts)
    return jnp.where(over, -jnp.inf, logits)


def routing_controller_forward(x_summary, visit_counts, max_visits_per_expert,
                               w1_p, b1_p, w2_p, b2_p, num_experts,
                               *, xla_fallback_batch=0):
    """Forward pass.

    x_summary: (B, input_dim) float, visit_counts: (B, num_experts) int.
    Returns logits (B, num_experts+1) f32 with over-budget experts set to -inf.
    """
    assert num_experts <= 31, "int32 over-budget bitmask supports up to 31 experts"
    B, input_dim = x_summary.shape
    out_dim = num_experts + 1
    hidden_pad = w1_p.shape[1]
    compute_dtype = w1_p.dtype

    # Per-row over-budget bitmask (tiny: 4 B/row). max_visits stays out of the kernel,
    # so changing the budget at runtime never retriggers a Mosaic compile.
    expert_ids = jnp.arange(num_experts, dtype=jnp.int32)
    over = (visit_counts.astype(jnp.int32) >= jnp.int32(max_visits_per_expert))
    bits = jnp.sum(jnp.left_shift(over.astype(jnp.int32), expert_ids[None, :]),
                   axis=1, keepdims=True).astype(jnp.int32)          # (B, 1)

    if B <= xla_fallback_batch:
        return _routing_forward_xla(x_summary, bits, w1_p, b1_p, w2_p, b2_p, num_experts)

    # Batch tiling: sublane-align, then pick a tile that (a) is large enough to amortize
    # per-step overhead and (b) yields >= 2 grid steps for large batches (v7x megacore).
    b_pad = _round_up(B, MIN_TILE_B)
    if b_pad > MIN_TILE_B:
        tile_b = min(TILE_B_MAX, max(MIN_TILE_B, _round_up(pl.cdiv(b_pad, 2), MIN_TILE_B)))
    else:
        tile_b = b_pad
    b_pad = _round_up(b_pad, tile_b)
    n_tiles = b_pad // tile_b

    # Only a cheap batch pad + bf16 cast on x (fused by XLA); no lane padding of inputs.
    x_p = jnp.pad(x_summary.astype(compute_dtype), ((0, b_pad - B), (0, 0)))
    bits_p = jnp.pad(bits, ((0, b_pad - B), (0, 0)))

    out = pl.pallas_call(
        _routing_kernel(num_experts),
        out_shape=jax.ShapeDtypeStruct((b_pad, out_dim), jnp.float32),
        grid_spec=pltpu.PrefetchScalarGridSpec(
            num_scalar_prefetch=0,
            grid=(n_tiles,),
            in_specs=[
                pl.BlockSpec((tile_b, input_dim), lambda i: (i, 0)),   # x (bf16)
                pl.BlockSpec((tile_b, 1), lambda i: (i, 0)),           # over-budget bits
                pl.BlockSpec((input_dim, hidden_pad), lambda i: (0, 0)),  # w1
                pl.BlockSpec((1, hidden_pad), lambda i: (0, 0)),          # b1
                pl.BlockSpec((hidden_pad, out_dim), lambda i: (0, 0)),    # w2
                pl.BlockSpec((1, out_dim), lambda i: (0, 0)),             # b2
            ],
            out_specs=pl.BlockSpec((tile_b, out_dim), lambda i: (i, 0)),
        ),
        compiler_params=pltpu.CompilerParams(
            dimension_semantics=("parallel",),
            vmem_limit_bytes=32 * 1024 * 1024),
    )(x_p, bits_p, w1_p, b1_p, w2_p, b2_p)

    return out[:B]   # strip batch padding only (output is already narrow in lanes)


def _reference(x, visits, max_visits, w1, b1, w2, b2, num_experts):
    """Pure-JAX f32 reference matching the PyTorch module's semantics."""
    h = jnp.maximum(x @ w1 + b1, 0.0)
    logits = h @ w2 + b2
    mask = visits >= max_visits
    return logits.at[:, :num_experts].set(
        jnp.where(mask, -jnp.inf, logits[:, :num_experts]))


if __name__ == "__main__":
    # Small, deterministic problem sizes consistent with the module.
    B = 2
    INPUT_DIM = 32
    HIDDEN_DIM = 32
    NUM_EXPERTS = 7
    MAX_VISITS = 2

    key = jax.random.PRNGKey(0)
    kx, k1, k2, k3, k4, k5, k6 = jax.random.split(key, 7)

    x_summary = jax.random.normal(kx, (B, INPUT_DIM), dtype=jnp.float32)

    # Deterministic parameter init (PyTorch nn.Linear-style uniform fan-in bound).
    bound1 = 1.0 / (INPUT_DIM ** 0.5)
    w1 = jax.random.uniform(k1, (INPUT_DIM, HIDDEN_DIM), jnp.float32, -bound1, bound1)
    b1 = jax.random.uniform(k2, (HIDDEN_DIM,), jnp.float32, -bound1, bound1)
    bound2 = 1.0 / (HIDDEN_DIM ** 0.5)
    w2 = jax.random.uniform(k3, (HIDDEN_DIM, NUM_EXPERTS + 1), jnp.float32, -bound2, bound2)
    b2 = jax.random.uniform(k4, (NUM_EXPERTS + 1,), jnp.float32, -bound2, bound2)

    # Visit counts: a few experts over budget to exercise the mask.
    visit_counts = jnp.array(
        [[0, 2, 1, 3, 0, 0, 2],
         [1, 0, 0, 0, 5, 0, 0]], dtype=jnp.int32)

    # One-time param prep (bf16 cast, hidden lane-padding).
    w1_p, b1_p, w2_p, b2_p = prepare_routing_params(w1, b1, w2, b2, NUM_EXPERTS)

    # --- small batch (single grid step) ---
    logits = routing_controller_forward(
        x_summary, visit_counts, MAX_VISITS, w1_p, b1_p, w2_p, b2_p, NUM_EXPERTS)
    logits = jax.block_until_ready(logits)

    ref = _reference(x_summary, visit_counts, MAX_VISITS, w1, b1, w2, b2, NUM_EXPERTS)
    assert logits.shape == (B, NUM_EXPERTS + 1)
    # -inf mask positions must match exactly; finite values within bf16 tolerance.
    assert bool(jnp.array_equal(jnp.isinf(logits), jnp.isinf(ref))), (logits, ref)
    assert bool(jnp.allclose(logits, ref, atol=1e-1, rtol=1e-1)), (logits, ref)

    # --- larger batch (multi-tile grid path, batch padding) ---
    B2 = 100
    x2 = jax.random.normal(k5, (B2, INPUT_DIM), dtype=jnp.float32)
    v2 = jax.random.randint(k6, (B2, NUM_EXPERTS), 0, 4, dtype=jnp.int32)
    logits2 = routing_controller_forward(
        x2, v2, MAX_VISITS, w1_p, b1_p, w2_p, b2_p, NUM_EXPERTS)
    logits2 = jax.block_until_ready(logits2)
    ref2 = _reference(x2, v2, MAX_VISITS, w1, b1, w2, b2, NUM_EXPERTS)
    assert logits2.shape == (B2, NUM_EXPERTS + 1)
    assert bool(jnp.array_equal(jnp.isinf(logits2), jnp.isinf(ref2)))
    assert bool(jnp.allclose(logits2, ref2, atol=1e-1, rtol=1e-1))

    print("KERNEL_OK")
</pallas_src>

<mosaic_0001>
module attributes {stable_mosaic.version = 11 : i64} {
  func.func @kernel(%arg0: i32, %arg1: memref<8x32xbf16, #tpu.memory_space<vmem>>, %arg2: memref<8x1xi32, #tpu.memory_space<vmem>>, %arg3: memref<32x128xbf16, #tpu.memory_space<vmem>>, %arg4: memref<1x128xf32, #tpu.memory_space<vmem>>, %arg5: memref<128x8xbf16, #tpu.memory_space<vmem>>, %arg6: memref<1x8xf32, #tpu.memory_space<vmem>>, %arg7: memref<8x8xf32, #tpu.memory_space<vmem>>) attributes {dimension_semantics = [#tpu.dimension_semantics<parallel>], iteration_bounds = array<i64: 1>, scalar_prefetch = 0 : i64, scratch_operands = 0 : i64, tpu.core_type = #tpu.core_type<tc>, window_params = [{transform_indices = @transform_0, window_bounds = array<i64: 8, 32>}, {transform_indices = @transform_1, window_bounds = array<i64: 8, 1>}, {pipeline_mode = #tpu.pipeline_mode<synchronous>, transform_indices = @transform_2, window_bounds = array<i64: 32, 128>}, {pipeline_mode = #tpu.pipeline_mode<synchronous>, transform_indices = @transform_3, window_bounds = array<i64: 1, 128>}, {pipeline_mode = #tpu.pipeline_mode<synchronous>, transform_indices = @transform_4, window_bounds = array<i64: 128, 8>}, {pipeline_mode = #tpu.pipeline_mode<synchronous>, transform_indices = @transform_5, window_bounds = array<i64: 1, 8>}, {transform_indices = @transform_6, window_bounds = array<i64: 8, 8>}]} {
    %c0 = arith.constant 0 : index
    %c0_0 = arith.constant 0 : index
    %0 = vector.load %arg1[%c0, %c0_0] : memref<8x32xbf16, #tpu.memory_space<vmem>>, vector<8x32xbf16>
    %c0_1 = arith.constant 0 : index
    %c0_2 = arith.constant 0 : index
    %1 = vector.load %arg3[%c0_1, %c0_2] : memref<32x128xbf16, #tpu.memory_space<vmem>>, vector<32x128xbf16>
    %cst = arith.constant dense<0.000000e+00> : vector<8x128xf32>
    %2 = tpu.matmul %0, %1, %cst {dimension_numbers = #tpu.dot_dimension_numbers<[1], [0], [0], [1], [0, 0, 1, 1], [], []>} : vector<8x32xbf16>, vector<32x128xbf16>, vector<8x128xf32> -> vector<8x128xf32>
    %c0_3 = arith.constant 0 : index
    %c0_4 = arith.constant 0 : index
    %3 = vector.load %arg4[%c0_3, %c0_4] : memref<1x128xf32, #tpu.memory_space<vmem>>, vector<1x128xf32>
    %4 = vector.broadcast %3 : vector<1x128xf32> to vector<8x128xf32>
    %5 = arith.addf %2, %4 : vector<8x128xf32>
    %cst_5 = arith.constant 0.000000e+00 : f32
    %6 = vector.broadcast %cst_5 : f32 to vector<8x128xf32>
    %7 = arith.maximumf %5, %6 : vector<8x128xf32>
    %8 = arith.truncf %7 : vector<8x128xf32> to vector<8x128xbf16>
    %c0_6 = arith.constant 0 : index
    %c0_7 = arith.constant 0 : index
    %9 = vector.load %arg5[%c0_6, %c0_7] : memref<128x8xbf16, #tpu.memory_space<vmem>>, vector<128x8xbf16>
    %cst_8 = arith.constant dense<0.000000e+00> : vector<8x8xf32>
    %10 = tpu.matmul %8, %9, %cst_8 {dimension_numbers = #tpu.dot_dimension_numbers<[1], [0], [0], [1], [0, 0, 1, 1], [], []>} : vector<8x128xbf16>, vector<128x8xbf16>, vector<8x8xf32> -> vector<8x8xf32>
    %c0_9 = arith.constant 0 : index
    %c0_10 = arith.constant 0 : index
    %11 = vector.load %arg6[%c0_9, %c0_10] : memref<1x8xf32, #tpu.memory_space<vmem>>, vector<1x8xf32>
    %12 = vector.broadcast %11 : vector<1x8xf32> to vector<8x8xf32>
    %13 = arith.addf %10, %12 : vector<8x8xf32>
    %14 = tpu.iota {dimensions = array<i32: 1>} : vector<8x8xi32>
    %c31_i32 = arith.constant 31 : i32
    %15 = vector.broadcast %c31_i32 : i32 to vector<8x8xi32>
    %16 = arith.minsi %14, %15 : vector<8x8xi32>
    %c0_11 = arith.constant 0 : index
    %c0_12 = arith.constant 0 : index
    %17 = vector.load %arg2[%c0_11, %c0_12] : memref<8x1xi32, #tpu.memory_space<vmem>>, vector<8x1xi32>
    %18 = vector.broadcast %17 : vector<8x1xi32> to vector<8x8xi32>
    %19 = arith.shrsi %18, %16 : vector<8x8xi32>
    %c1_i32 = arith.constant 1 : i32
    %20 = vector.broadcast %c1_i32 : i32 to vector<8x8xi32>
    %21 = arith.andi %19, %20 : vector<8x8xi32>
    %c1_i32_13 = arith.constant 1 : i32
    %22 = vector.broadcast %c1_i32_13 : i32 to vector<8x8xi32>
    %23 = arith.cmpi eq, %21, %22 : vector<8x8xi32>
    %c7_i32 = arith.constant 7 : i32
    %24 = vector.broadcast %c7_i32 : i32 to vector<8x8xi32>
    %25 = arith.cmpi slt, %14, %24 : vector<8x8xi32>
    %26 = arith.andi %23, %25 : vector<8x8xi1>
    %cst_14 = arith.constant 0xFF800000 : f32
    %27 = vector.broadcast %cst_14 : f32 to vector<8x8xf32>
    %28 = arith.select %26, %27, %13 : vector<8x8xi1>, vector<8x8xf32>
    %c0_15 = arith.constant 0 : index
    %c0_16 = arith.constant 0 : index
    %29 = vector.load %arg7[%c0_15, %c0_16] : memref<8x8xf32, #tpu.memory_space<vmem>>, vector<8x8xf32>
    tpu.vector_store %arg7[%c0_15, %c0_16], %28 {strides = array<i32>} : memref<8x8xf32, #tpu.memory_space<vmem>>, vector<8x8xf32>,
    return
  }
  func.func @transform_0(%arg0: i32) -> (i32, i32) {
    %c0_i32 = arith.constant 0 : i32
    %c0_i32_0 = arith.constant 0 : i32
    return %arg0, %c0_i32 : i32, i32
  }
  func.func @transform_1(%arg0: i32) -> (i32, i32) {
    %c0_i32 = arith.constant 0 : i32
    %c0_i32_0 = arith.constant 0 : i32
    return %arg0, %c0_i32 : i32, i32
  }
  func.func @transform_2(%arg0: i32) -> (i32, i32) {
    %c0_i32 = arith.constant 0 : i32
    %c0_i32_0 = arith.constant 0 : i32
    %c0_i32_1 = arith.constant 0 : i32
    return %c0_i32, %c0_i32_0 : i32, i32
  }
  func.func @transform_3(%arg0: i32) -> (i32, i32) {
    %c0_i32 = arith.constant 0 : i32
    %c0_i32_0 = arith.constant 0 : i32
    %c0_i32_1 = arith.constant 0 : i32
    return %c0_i32, %c0_i32_0 : i32, i32
  }
  func.func @transform_4(%arg0: i32) -> (i32, i32) {
    %c0_i32 = arith.constant 0 : i32
    %c0_i32_0 = arith.constant 0 : i32
    %c0_i32_1 = arith.constant 0 : i32
    return %c0_i32, %c0_i32_0 : i32, i32
  }
  func.func @transform_5(%arg0: i32) -> (i32, i32) {
    %c0_i32 = arith.constant 0 : i32
    %c0_i32_0 = arith.constant 0 : i32
    %c0_i32_1 = arith.constant 0 : i32
    return %c0_i32, %c0_i32_0 : i32, i32
  }
  func.func @transform_6(%arg0: i32) -> (i32, i32) {
    %c0_i32 = arith.constant 0 : i32
    %c0_i32_0 = arith.constant 0 : i32
    return %arg0, %c0_i32 : i32, i32
  }
}

</mosaic_0001>

<llo_original>
// kernel: tpu_custom_call.1
$region0: #{tpu_custom_call.1}
  #allocation0 [shape = 'u32[]', space=smem, size = 0x4, offset = 0x4, fixed_abs, tag = 'smem constant byte address 0x4 - core index']
  #allocation1 [shape = 'u32[144,128]{1,0:T(1,128)}', space=vmem, size = 0x12000, scoped, tag = 'internal scratch']
  %s0 = inlined_call_operand.vmem [shape: bf16[8,32], index: 0, kind: input, shape index: {}]
  %s1 = inlined_call_operand.vmem [shape: s32[8,1], index: 1, kind: input, shape index: {}]
  %s2 = inlined_call_operand.vmem [shape: bf16[32,128], index: 2, kind: input, shape index: {}]
  %s3 = inlined_call_operand.vmem [shape: f32[1,128], index: 3, kind: input, shape index: {}]
  %s4 = inlined_call_operand.vmem [shape: bf16[128,8], index: 4, kind: input, shape index: {}]
  %s5 = inlined_call_operand.vmem [shape: f32[1,8], index: 5, kind: input, shape index: {}]
  %s6 = inlined_call_operand.hbm [shape: f32[8,8], index: 6, kind: output, shape index: {}]
  %s7 = sld [smem:[#allocation0]]
  $region34: #{tpu_custom_call.1} parent=0
    _
  %s9 = ssub.s32 1, %s7
  %s10 = scalar_select 0, %s9, %s7
  $region1: #{tpu_custom_call.1} parent=0
    #allocation2 [shape = 'u8[4096]{0}', space=vmem, size = 0x1000, scoped, tag = 'output window, operand 0, single buffered']
    #allocation3 [shape = 's32[1]{0}', space=sflag, size = 0x4, scoped, tag = 'scoped memory for tpu_custom_call.1']
    %11 = vsyncpa [#allocation3], 0
    // Predicated region
    $region2: #{tpu_custom_call.1} parent=1 // pred_check
      _
    $region3: #{tpu_custom_call.1} parent=1 // pred_check_branch
      %13 = sbr.rel (0) target = $region5
    $region4: #{tpu_custom_call.1} parent=1 // pred_region
      _
    $region5: #{tpu_custom_call.1} parent=1 // pred_fallthru
      _
    // Predicated region
    $region6: #{tpu_custom_call.1} parent=1 // pred_check
      _
    $region7: #{tpu_custom_call.1} parent=1 // pred_check_branch
      %15 = sbr.rel (0) target = $region9
    $region8: #{tpu_custom_call.1} parent=1 // pred_region
      _
    $region9: #{tpu_custom_call.1} parent=1 // pred_fallthru
      _
    // Predicated region
    $region10: #{tpu_custom_call.1} parent=1 // pred_check
      _
    $region11: #{tpu_custom_call.1} parent=1 // pred_check_branch
      %17 = sbr.rel (0) target = $region13
    $region12: #{tpu_custom_call.1} parent=1 // pred_region
      _
    $region13: #{tpu_custom_call.1} parent=1 // pred_fallthru
      _
    // Predicated region
    $region14: #{tpu_custom_call.1} parent=1 // pred_check
      _
    $region15: #{tpu_custom_call.1} parent=1 // pred_check_branch
      %19 = sbr.rel (0) target = $region17
    $region16: #{tpu_custom_call.1} parent=1 // pred_region
      _
    $region17: #{tpu_custom_call.1} parent=1 // pred_fallthru
      _
    // Predicated region
    $region18: #{tpu_custom_call.1} parent=1 // pred_check
      _
    $region19: #{tpu_custom_call.1} parent=1 // pred_check_branch
      %21 = sbr.rel (0) target = $region21
    $region20: #{tpu_custom_call.1} parent=1 // pred_region
      _
    $region21: #{tpu_custom_call.1} parent=1 // pred_fallthru
      _
    // Predicated region
    $region22: #{tpu_custom_call.1} parent=1 // pred_check
      _
    $region23: #{tpu_custom_call.1} parent=1 // pred_check_branch
      %23 = sbr.rel (0) target = $region25
    $region24: #{tpu_custom_call.1} parent=1 // pred_region
      _
    $region25: #{tpu_custom_call.1} parent=1 // pred_fallthru
      _
    %v25 = vld [vmem:[%s0] sm:$0xf]
    %v26 = vld [vmem:[%s2] sm:$0xf]
    %v27 = vld [vmem:[%s2 + $0x4] sm:$0xf]
    %v28 = vld [vmem:[%s2 + $0x8] sm:$0xf]
    %v29 = vld [vmem:[%s2 + $0xc] sm:$0xf]
    %v30 = vld [vmem:[%s3] sm:$0x1]
    %v32 = vlaneseq
    %v33 = vshrl.u32 %v32, 7
    %v34 = vsub.s32 0, %v33
    %v35 = vrot.slane %v30, %v34
    %v41 = vunpack.c.l.b16 %v26
    %v42 = vunpack.c.l.b16 %v27
    %v43 = vunpack.c.l.b16 %v28
    %v44 = vunpack.c.l.b16 %v29
    %v45 = vpack.c.b16 %v42, %v41
    %v46 = vpack.c.b16 %v44, %v43
    %vm49 = vcmask 261120
    %v51 = vsel %vm49, %v25, 0
    %53 = vmatprep.subr.bf16.mxu0 0
    %54 = vmatpush1.bf16.msra.mxu0 0
    %55 = vmatprep.subr.bf16.mxu0 0
    %56 = vmatpush1.bf16.msra.mxu0 0
    %57 = vmatprep.subr.bf16.mxu0 0
    %58 = vmatpush1.bf16.msra.mxu0 0
    %59 = vmatprep.subr.bf16.mxu0 0
    %60 = vmatpush1.bf16.msra.mxu0 0
    %61 = vmatprep.subr.bf16.mxu0 0
    %62 = vmatpush1.bf16.msra.mxu0 0
    %63 = vmatprep.subr.bf16.mxu0 0
    %64 = vmatpush1.bf16.msra.mxu0 0
    %65 = vmatprep.subr.bf16.mxu0 0
    %66 = vmatpush1.bf16.msra.mxu0 %v46
    %67 = vmatprep.subr.bf16.mxu0 0
    %68 = vmatpush1.bf16.msra.mxu0 %v45
    %69 = vmatprep.subr.bf16.mxu0 0
    %70 = vmatpush2.bf16.msra.mxu0 0
    %71 = vmatprep.subr.bf16.mxu0 0
    %72 = vmatpush2.bf16.msra.mxu0 0
    %73 = vmatprep.subr.bf16.mxu0 0
    %74 = vmatpush2.bf16.msra.mxu0 0
    %75 = vmatprep.subr.bf16.mxu0 0
    %76 = vmatpush2.bf16.msra.mxu0 0
    %77 = vmatprep.subr.bf16.mxu0 0
    %78 = vmatpush2.bf16.msra.mxu0 0
    %79 = vmatprep.subr.bf16.mxu0 0
    %80 = vmatpush2.bf16.msra.mxu0 0
    %81 = vmatprep.subr.bf16.mxu0 0
    %82 = vmatpush2.bf16.msra.mxu0 0
    %83 = vmatprep.subr.bf16.mxu0 0
    %84 = vmatpush2.bf16.msra.mxu0 0
    %85 = vmatprep.mubr.bf16.mxu0 0
    %86 = vmatmul.mubr.bf16.gmra.mxu0 %v51
    %v87 = vpop.f32.mrf.mxu0
    %v88 = vadd.f32 %v35, %v87
    %v89 = vpop.f32.mrf.mxu0
    %v90 = vpop.f32.mrf.mxu0
    %v91 = vpop.f32.mrf.mxu0
    %92 = vdwg.mxu0
    %v93 = vmax.f32 %v88, 0.0
    %v94 = vpack.c.bf16 %v93, %v93
    %v95 = vld [vmem:[%s4] sm:$0xf]
    %v96 = vld [vmem:[%s4 + $0x4] sm:$0xf]
    %v97 = vld [vmem:[%s4 + $0x8] sm:$0xf]
    %v98 = vld [vmem:[%s4 + $0xc] sm:$0xf]
    %v99 = vld [vmem:[%s4 + $0x10] sm:$0xf]
    %v100 = vld [vmem:[%s4 + $0x14] sm:$0xf]
    %v101 = vld [vmem:[%s4 + $0x18] sm:$0xf]
    %v102 = vld [vmem:[%s4 + $0x1c] sm:$0xf]
    %v103 = vld [vmem:[%s4 + $0x20] sm:$0xf]
    %v104 = vld [vmem:[%s4 + $0x24] sm:$0xf]
    %v105 = vld [vmem:[%s4 + $0x28] sm:$0xf]
    %v106 = vld [vmem:[%s4 + $0x2c] sm:$0xf]
    %v107 = vld [vmem:[%s4 + $0x30] sm:$0xf]
    %v108 = vld [vmem:[%s4 + $0x34] sm:$0xf]
    %v109 = vld [vmem:[%s4 + $0x38] sm:$0xf]
    %v110 = vld [vmem:[%s4 + $0x3c] sm:$0xf]
    %v111 = vld [vmem:[%s5] sm:$0x1]
    %v113 = vlaneseq
    %v114 = vshrl.u32 %v113, 7
    %v115 = vsub.s32 0, %v114
    %v116 = vrot.slane %v111, %v115
    %v134 = vunpack.c.l.b16 %v95
    %v135 = vunpack.c.l.b16 %v96
    %v136 = vunpack.c.l.b16 %v97
    %v137 = vunpack.c.l.b16 %v98
    %v138 = vunpack.c.l.b16 %v99
    %v139 = vunpack.c.l.b16 %v100
    %v140 = vunpack.c.l.b16 %v101
    %v141 = vunpack.c.l.b16 %v102
    %v142 = vunpack.c.l.b16 %v103
    %v143 = vunpack.c.l.b16 %v104
    %v144 = vunpack.c.l.b16 %v105
    %v145 = vunpack.c.l.b16 %v106
    %v146 = vunpack.c.l.b16 %v107
    %v147 = vunpack.c.l.b16 %v108
    %v148 = vunpack.c.l.b16 %v109
    %v149 = vunpack.c.l.b16 %v110
    %v150 = vpack.c.b16 %v135, %v134
    %v151 = vpack.c.b16 %v137, %v136
    %v152 = vpack.c.b16 %v139, %v138
    %v153 = vpack.c.b16 %v141, %v140
    %v154 = vpack.c.b16 %v143, %v142
    %v155 = vpack.c.b16 %v145, %v144
    %v156 = vpack.c.b16 %v147, %v146
    %v157 = vpack.c.b16 %v149, %v148
    %166 = vmatprep.subr.bf16.mxu0 0
    %167 = vmatpush1.bf16.msra.mxu0 %v157
    %168 = vmatprep.subr.bf16.mxu0 0
    %169 = vmatpush1.bf16.msra.mxu0 %v156
    %170 = vmatprep.subr.bf16.mxu0 0
    %171 = vmatpush1.bf16.msra.mxu0 %v155
    %172 = vmatprep.subr.bf16.mxu0 0
    %173 = vmatpush1.bf16.msra.mxu0 %v154
    %174 = vmatprep.subr.bf16.mxu0 0
    %175 = vmatpush1.bf16.msra.mxu0 %v153
    %176 = vmatprep.subr.bf16.mxu0 0
    %177 = vmatpush1.bf16.msra.mxu0 %v152
    %178 = vmatprep.subr.bf16.mxu0 0
    %179 = vmatpush1.bf16.msra.mxu0 %v151
    %180 = vmatprep.subr.bf16.mxu0 0
    %181 = vmatpush1.bf16.msra.mxu0 %v150
    %182 = vmatprep.subr.bf16.mxu0 0
    %183 = vmatpush2.bf16.msra.mxu0 0
    %184 = vmatprep.subr.bf16.mxu0 0
    %185 = vmatpush2.bf16.msra.mxu0 0
    %186 = vmatprep.subr.bf16.mxu0 0
    %187 = vmatpush2.bf16.msra.mxu0 0
    %188 = vmatprep.subr.bf16.mxu0 0
    %189 = vmatpush2.bf16.msra.mxu0 0
    %190 = vmatprep.subr.bf16.mxu0 0
    %191 = vmatpush2.bf16.msra.mxu0 0
    %192 = vmatprep.subr.bf16.mxu0 0
    %193 = vmatpush2.bf16.msra.mxu0 0
    %194 = vmatprep.subr.bf16.mxu0 0
    %195 = vmatpush2.bf16.msra.mxu0 0
    %196 = vmatprep.subr.bf16.mxu0 0
    %197 = vmatpush2.bf16.msra.mxu0 0
    %198 = vmatprep.mubr.bf16.mxu0 0
    %199 = vmatmul.mubr.bf16.gmra.mxu0 %v94
    %v200 = vpop.f32.mrf.mxu0
    %v201 = vadd.f32 %v116, %v200
    %v202 = vpop.f32.mrf.mxu0
    %v203 = vpop.f32.mrf.mxu0
    %v204 = vpop.f32.mrf.mxu0
    %205 = vdwg.mxu0
    %v206 = vlaneseq
    %v207 = vand.u32 %v206, 127
    %vm208 = vcmp.lt.s32.totalorder %v207, 31
    %v209 = vsel %vm208, %v207, 31
    %v210 = vld [vmem:[%s1] sm:$0xff]
    %211 = vset.pattern.permute.xlu0 0
    %212 = vperm.xlu0 %211, %v210
    %v213 = vpop.permute.xlu0 %212
    %v214 = vshra.s32 %v213, %v209
    %v215 = vand.u32 %v214, 1
    %vm216 = vcmp.eq.s32.totalorder %v215, 1
    %vm217 = vcmp.lt.s32.totalorder %v207, 7
    %vm218 = vmand %vm216, %vm217
    %v219 = vsel %vm218, -inf, %v201
    %vm220 = vcmask 64512
    %221 = vst.msk [vmem:[#allocation2] sm:$0xff] %vm220, %v219
    // Predicated region
    $region26: #{tpu_custom_call.1} parent=1 // pred_check
      _
    $region27: #{tpu_custom_call.1} parent=1 // pred_check_branch
      %223 = sbr.rel (0) target = $region29
    $region28: #{tpu_custom_call.1} parent=1 // pred_region
      %s225 = ssub.s32 128, 128
      %226 = vsyncadd [#allocation3], %s225
      %s228 = sshll.u32 [#allocation2], 4
      %s229 = int_to_ptr.vmem [resolvable:$true] %s228
      %231 = dma.vmem_to_hbm [thread:$0]  %s229, 128, %s6, [#allocation3]
    $region29: #{tpu_custom_call.1} parent=1 // pred_fallthru
      _
    // Predicated region
    $region30: #{tpu_custom_call.1} parent=1 // pred_check
      _
    $region31: #{tpu_custom_call.1} parent=1 // pred_check_branch
      %233 = sbr.rel (0) target = $region33
    $region32: #{tpu_custom_call.1} parent=1 // pred_region
      %234 = dma.done [#allocation3], 128
    $region33: #{tpu_custom_call.1} parent=1 // pred_fallthru
      _
    %235 = vsyncpa [#allocation3], 1

</llo_original>
